<compile_context>
chip_gen: v5e
topology: v5e:2x2
jax: 0.10.0
libtpu: 0.0.40
codegen_flags: <defaults>
</compile_context>

<pallas_src>
import jax
import jax.numpy as jnp
from jax import lax
from jax.experimental import pallas as pl
from jax.experimental.pallas import tpu as pltpu

OTHER = 1.0


def linear_sub_relu_kernel(x_ref, w_ref, b_ref, o_ref):
    # x_ref: (B, IN), w_ref: (OUT, IN) (PyTorch convention), b_ref: (1, OUT)
    # y[b, o] = sum_i x[b, i] * w[o, i]  -> contract axis 1 with axis 1.
    y = lax.dot_general(
        x_ref[...], w_ref[...],
        dimension_numbers=(((1,), (1,)), ((), ())),
        preferred_element_type=jnp.float32,
    )
    y = y + b_ref[...]                 # bias (broadcast (1, OUT) over batch)
    y = y - OTHER                      # v2 = v1 - other
    o_ref[...] = jnp.maximum(y, 0.0).astype(o_ref.dtype)  # relu


def model_forward(x, w, b):
    """x: (B, 15) f32, w: (15, 15) PyTorch (out, in) convention, b: (15,)."""
    B, IN = x.shape
    OUT = w.shape[0]
    b2 = b.reshape(1, OUT)             # 2-D, TPU-friendly layout
    vmem_spec = pl.BlockSpec(memory_space=pltpu.MemorySpace.VMEM)
    return pl.pallas_call(
        linear_sub_relu_kernel,
        out_shape=jax.ShapeDtypeStruct((B, OUT), x.dtype),
        in_specs=[vmem_spec, vmem_spec, vmem_spec],
        out_specs=vmem_spec,
    )(x, w, b2)


if __name__ == "__main__":
    key = jax.random.PRNGKey(0)
    kx, kw, kb = jax.random.split(key, 3)

    # Inputs / params (deterministic). Linear(15, 15): weight (15, 15), bias (15,)
    x1 = jax.random.normal(kx, (2, 15), dtype=jnp.float32)
    bound = 1.0 / jnp.sqrt(15.0)  # mimic PyTorch default uniform init bound
    w = jax.random.uniform(kw, (15, 15), minval=-bound, maxval=bound,
                           dtype=jnp.float32)
    b = jax.random.uniform(kb, (15,), minval=-bound, maxval=bound,
                           dtype=jnp.float32)

    out = model_forward(x1, w, b)
    out = jax.block_until_ready(out)

    # Reference check in plain JAX
    ref = jnp.maximum(x1 @ w.T + b - OTHER, 0.0)
    assert out.shape == (2, 15)
    assert jnp.allclose(out, ref, atol=1e-5), "mismatch vs reference"

    print("KERNEL_OK")
</pallas_src>

<mosaic_0001>
module attributes {stable_mosaic.version = 11 : i64} {
  func.func @linear_sub_relu_kernel(%arg0: memref<2x15xf32, #tpu.memory_space<vmem>>, %arg1: memref<15x15xf32, #tpu.memory_space<vmem>>, %arg2: memref<1x15xf32, #tpu.memory_space<vmem>>, %arg3: memref<2x15xf32, #tpu.memory_space<vmem>>) attributes {dimension_semantics = [], scalar_prefetch = 0 : i64, scratch_operands = 0 : i64, tpu.core_type = #tpu.core_type<tc>} {
    %c0 = arith.constant 0 : index
    %c0_0 = arith.constant 0 : index
    %0 = vector.load %arg0[%c0, %c0_0] : memref<2x15xf32, #tpu.memory_space<vmem>>, vector<2x15xf32>
    %c0_1 = arith.constant 0 : index
    %c0_2 = arith.constant 0 : index
    %1 = vector.load %arg1[%c0_1, %c0_2] : memref<15x15xf32, #tpu.memory_space<vmem>>, vector<15x15xf32>
    %cst = arith.constant dense<0.000000e+00> : vector<2x15xf32>
    %2 = tpu.matmul %0, %1, %cst {dimension_numbers = #tpu.dot_dimension_numbers<[1], [1], [0], [0], [0, 0, 1, 0], [], []>} : vector<2x15xf32>, vector<15x15xf32>, vector<2x15xf32> -> vector<2x15xf32>
    %c0_3 = arith.constant 0 : index
    %c0_4 = arith.constant 0 : index
    %3 = vector.load %arg2[%c0_3, %c0_4] : memref<1x15xf32, #tpu.memory_space<vmem>>, vector<1x15xf32>
    %4 = vector.broadcast %3 : vector<1x15xf32> to vector<2x15xf32>
    %5 = arith.addf %2, %4 : vector<2x15xf32>
    %cst_5 = arith.constant 1.000000e+00 : f32
    %6 = vector.broadcast %cst_5 : f32 to vector<2x15xf32>
    %7 = arith.subf %5, %6 : vector<2x15xf32>
    %cst_6 = arith.constant 0.000000e+00 : f32
    %8 = vector.broadcast %cst_6 : f32 to vector<2x15xf32>
    %9 = arith.maximumf %7, %8 : vector<2x15xf32>
    %c0_7 = arith.constant 0 : index
    %c0_8 = arith.constant 0 : index
    %10 = vector.load %arg3[%c0_7, %c0_8] : memref<2x15xf32, #tpu.memory_space<vmem>>, vector<2x15xf32>
    tpu.vector_store %arg3[%c0_7, %c0_8], %9 {strides = array<i32>} : memref<2x15xf32, #tpu.memory_space<vmem>>, vector<2x15xf32>,
    return
  }
}

</mosaic_0001>

<llo_original>
// kernel: tpu_custom_call.1
$region0: #{tpu_custom_call.1}
  #allocation0 [shape = 'u32[]', space=smem, size = 0x4, offset = 0x4, fixed_abs, tag = 'smem constant byte address 0x4 - core index']
  #allocation1 [shape = 'u32[72,128]{1,0:T(1,128)}', space=vmem, size = 0x9000, scoped, tag = 'internal scratch']
  %s0 = inlined_call_operand.hbm [shape: f32[2,15], index: 0, kind: input, shape index: {}]
  %s1 = inlined_call_operand.hbm [shape: f32[15,15], index: 1, kind: input, shape index: {}]
  %s2 = inlined_call_operand.vmem [shape: f32[1,15], index: 2, kind: input, shape index: {}]
  %s3 = inlined_call_operand.hbm [shape: f32[2,15], index: 3, kind: output, shape index: {}]
  %s4 = sld [smem:[#allocation0]]
  $region30: #{tpu_custom_call.1} parent=0
    _
  %s6 = ssub.s32 1, %s4
  %s7 = scalar_select 0, %s6, %s4
  $region1: #{tpu_custom_call.1} parent=0
    #allocation2 [shape = 'u8[1024]{0}', space=vmem, size = 0x400, scoped, tag = 'input window, operand 0, single buffered']
    #allocation3 [shape = 's32[1]{0}', space=sflag, size = 0x4, scoped, tag = 'scoped memory for tpu_custom_call.1']
    #allocation4 [shape = 's32[1]{0}', space=sflag, size = 0x4, scoped, tag = 'scoped memory for tpu_custom_call.1']
    #allocation5 [shape = 'u8[8192]{0}', space=vmem, size = 0x2000, scoped, tag = 'input window, operand 1, single buffered']
    #allocation6 [shape = 's32[1]{0}', space=sflag, size = 0x4, scoped, tag = 'scoped memory for tpu_custom_call.1']
    #allocation7 [shape = 'u8[1024]{0}', space=vmem, size = 0x400, scoped, tag = 'output window, operand 0, single buffered']
    %8 = vsyncpa [#allocation3], 0
    %9 = vsyncpa [#allocation6], 0
    %10 = vsyncpa [#allocation4], 0
    // Predicated region
    $region2: #{tpu_custom_call.1} parent=1 // pred_check
      _
    $region3: #{tpu_custom_call.1} parent=1 // pred_check_branch
      %12 = sbr.rel (0) target = $region5
    $region4: #{tpu_custom_call.1} parent=1 // pred_region
      %14 = vsyncadd [#allocation3], 0
      %s16 = sshll.u32 %s0, 4
      %s17 = int_to_ptr.hbm [resolvable:$true] %s16
      %s18 = sshll.u32 [#allocation2], 4
      %s19 = int_to_ptr.vmem [resolvable:$true] %s18
      %21 = dma.hbm_to_vmem [thread:$0]  %s17, 32, %s19, [#allocation3]
    $region5: #{tpu_custom_call.1} parent=1 // pred_fallthru
      _
    // Predicated region
    $region6: #{tpu_custom_call.1} parent=1 // pred_check
      _
    $region7: #{tpu_custom_call.1} parent=1 // pred_check_branch
      %23 = sbr.rel (0) target = $region9
    $region8: #{tpu_custom_call.1} parent=1 // pred_region
      %25 = vsyncadd [#allocation6], 0
      %s26 = sshll.u32 %s1, 4
      %s27 = int_to_ptr.hbm [resolvable:$true] %s26
      %s28 = sshll.u32 [#allocation5], 4
      %s29 = int_to_ptr.vmem [resolvable:$true] %s28
      %34 = dma.hbm_to_vmem [thread:$0]  %s27, 256, %s29, [#allocation6], 128, 128, 8
    $region9: #{tpu_custom_call.1} parent=1 // pred_fallthru
      _
    // Predicated region
    $region10: #{tpu_custom_call.1} parent=1 // pred_check
      _
    $region11: #{tpu_custom_call.1} parent=1 // pred_check_branch
      %36 = sbr.rel (0) target = $region13
    $region12: #{tpu_custom_call.1} parent=1 // pred_region
      _
    $region13: #{tpu_custom_call.1} parent=1 // pred_fallthru
      _
    // Predicated region
    $region14: #{tpu_custom_call.1} parent=1 // pred_check
      _
    $region15: #{tpu_custom_call.1} parent=1 // pred_check_branch
      %38 = sbr.rel (0) target = $region17
    $region16: #{tpu_custom_call.1} parent=1 // pred_region
      %40 = dma.done [#allocation3], 32
    $region17: #{tpu_custom_call.1} parent=1 // pred_fallthru
      _
    // Predicated region
    $region18: #{tpu_custom_call.1} parent=1 // pred_check
      _
    $region19: #{tpu_custom_call.1} parent=1 // pred_check_branch
      %42 = sbr.rel (0) target = $region21
    $region20: #{tpu_custom_call.1} parent=1 // pred_region
      %44 = dma.done [#allocation6], 256
    $region21: #{tpu_custom_call.1} parent=1 // pred_fallthru
      _
    %v45 = vld [vmem:[#allocation2] sm:$0x3]
    %v46 = vld [vmem:[#allocation5] sm:$0xff]
    %v47 = vld [vmem:[#allocation5 + $0x8] sm:$0x7f]
    %v48 = vld [vmem:[%s2] sm:$0x1]
    %v50 = vperm.slane %v48, 0
    %vm52 = vcmask 121856
    %v54 = vsel %vm52, %v45, 0
    %v57 = vsel %vm52, %v46, 0
    %v60 = vsel %vm52, %v47, 0
    %62 = vmatpush.xpose.msra.mxu0 0.0
    %63 = vmatpush.xpose.msra.mxu0 0.0
    %64 = vmatpush.xpose.msra.mxu0 0.0
    %65 = vmatpush.xpose.msra.mxu0 0.0
    %66 = vmatpush.xpose.msra.mxu0 0.0
    %67 = vmatpush.xpose.msra.mxu0 0.0
    %68 = vmatpush.xpose.msra.mxu0 0.0
    %69 = vmatpush.xpose.msra.mxu0 0.0
    %70 = vmatpush.xpose.msra.mxu0 0.0
    %71 = vmatpush.xpose.msra.mxu0 0.0
    %72 = vmatpush.xpose.msra.mxu0 0.0
    %73 = vmatpush.xpose.msra.mxu0 0.0
    %74 = vmatpush.xpose.msra.mxu0 0.0
    %75 = vmatpush.xpose.msra.mxu0 0.0
    %76 = vmatpush.xpose.msra.mxu0 %v60
    %77 = vmatpush.xpose.msra.mxu0 %v57
    %78 = vmatmul.f32.gmra.mxu0 %v54
    %v79 = vpop.f32.mrf.mxu0
    %v80 = vadd.f32 %v50, %v79
    %81 = vdwg.mxu0
    %v82 = vsub.f32 %v80, 1.0
    %v83 = vmax.f32 %v82, 0.0
    %vm84 = vcmask 115712
    %85 = vst.msk [vmem:[#allocation7] sm:$0x3] %vm84, %v83
    // Predicated region
    $region22: #{tpu_custom_call.1} parent=1 // pred_check
      _
    $region23: #{tpu_custom_call.1} parent=1 // pred_check_branch
      %87 = sbr.rel (0) target = $region25
    $region24: #{tpu_custom_call.1} parent=1 // pred_region
      %89 = vsyncadd [#allocation4], 0
      %s91 = sshll.u32 [#allocation7], 4
      %s92 = int_to_ptr.vmem [resolvable:$true] %s91
      %s93 = sshll.u32 %s3, 4
      %s94 = int_to_ptr.hbm [resolvable:$true] %s93
      %96 = dma.vmem_to_hbm [thread:$0]  %s92, 32, %s94, [#allocation4]
    $region25: #{tpu_custom_call.1} parent=1 // pred_fallthru
      _
    // Predicated region
    $region26: #{tpu_custom_call.1} parent=1 // pred_check
      _
    $region27: #{tpu_custom_call.1} parent=1 // pred_check_branch
      %98 = sbr.rel (0) target = $region29
    $region28: #{tpu_custom_call.1} parent=1 // pred_region
      %100 = dma.done [#allocation4], 32
    $region29: #{tpu_custom_call.1} parent=1 // pred_fallthru
      _
    %101 = vsyncpa [#allocation3], 1
    %102 = vsyncpa [#allocation6], 1
    %103 = vsyncpa [#allocation4], 1

</llo_original>
